<compile_context>
chip_gen: v5e
topology: v5e:2x2
jax: 0.10.0
libtpu: 0.0.40
codegen_flags: <defaults>
</compile_context>

<pallas_src>
import math
from functools import partial

import jax
import jax.numpy as jnp
from jax import lax
from jax.experimental import pallas as pl
from jax.experimental.pallas import tpu as pltpu


# ----------------------------------------------------------------------------
# kernel
# ----------------------------------------------------------------------------
def _flash_kernel(*refs, scale, causal, has_mask, hb, d, tq, tk, compute_dtype):
    if has_mask:
        q_ref, k_ref, v_ref, mask_ref, o_ref, qs_ref, m_ref, l_ref, acc_ref = refs
    else:
        q_ref, k_ref, v_ref, o_ref, qs_ref, m_ref, l_ref, acc_ref = refs
        mask_ref = None

    i = pl.program_id(2)            # query-tile index
    j = pl.program_id(3)            # key/value-tile index (reduction axis, innermost)
    nj = pl.num_programs(3)

    @pl.when(j == 0)
    def _init():
        # q is resident across the whole KV loop for this (b, h, i): fold the
        # softmax scale and the MXU-dtype cast once instead of per KV step.
        qs_ref[...] = (q_ref[0, 0] * scale).astype(qs_ref.dtype)
        m_ref[...] = jnp.full((hb, tq, 1), -jnp.inf, jnp.float32)
        l_ref[...] = jnp.zeros((hb, tq, 1), jnp.float32)
        acc_ref[...] = jnp.zeros((hb, tq, d), jnp.float32)

    def _update(apply_causal_mask):
        q = qs_ref[...]                                   # (hb, tq, d), pre-scaled
        k = k_ref[0, 0].astype(compute_dtype)             # (hb, tk, d)
        v = v_ref[0, 0].astype(compute_dtype)             # (hb, tk, d)

        # scores: contract on d (last dim of both) -> native MXU N-T layout,
        # f32 accumulation.
        s = lax.dot_general(
            q, k, dimension_numbers=(((2,), (2,)), ((0,), (0,))),
            preferred_element_type=jnp.float32)           # (hb, tq, tk) f32

        if has_mask:
            # j-resident mask block; (1, 1, tk) broadcast add.
            s = s + mask_ref[0, pl.ds(j, 1), :, :]

        if apply_causal_mask:
            q_pos = i * tq + lax.broadcasted_iota(jnp.int32, (tq, tk), 0)
            k_pos = j * tk + lax.broadcasted_iota(jnp.int32, (tq, tk), 1)
            s = s + jnp.where(k_pos > q_pos,
                              jnp.float32(-10000.0), jnp.float32(0.0))[None]

        # online softmax update (f32 statistics)
        m_prev = m_ref[...]
        m_new = jnp.maximum(m_prev, jnp.max(s, axis=-1, keepdims=True))
        alpha = jnp.exp(m_prev - m_new)
        p = jnp.exp(s - m_new)                            # (hb, tq, tk) f32

        l_ref[...] = alpha * l_ref[...] + jnp.sum(p, axis=-1, keepdims=True)
        pv = lax.dot_general(
            p.astype(compute_dtype), v,
            dimension_numbers=(((2,), (1,)), ((0,), (0,))),
            preferred_element_type=jnp.float32)           # (hb, tq, d) f32
        acc_ref[...] = alpha * acc_ref[...] + pv
        m_ref[...] = m_new

    if causal:
        # Blocks entirely above the diagonal are skipped (their reference
        # -10000-masked weights underflow to exactly 0 in f32); their K/V tiles
        # were also not fetched (clamped index_map in the wrapper).  Only
        # diagonal-crossing boundary blocks pay for the causal mask.
        in_range = j * tk <= (i + 1) * tq - 1
        crosses_diag = (j + 1) * tk - 1 > i * tq

        @pl.when(jnp.logical_and(in_range, crosses_diag))
        def _boundary():
            _update(apply_causal_mask=True)

        @pl.when(jnp.logical_and(in_range, jnp.logical_not(crosses_diag)))
        def _interior():
            _update(apply_causal_mask=False)
    else:
        _update(apply_causal_mask=False)

    @pl.when(j == nj - 1)
    def _finalize():
        l = l_ref[...]
        r = pl.reciprocal(l, approx=True)                 # EUP slot (otherwise idle)
        r = r * (2.0 - l * r)                             # one Newton step -> ~f32 exact
        out = acc_ref[...] * r                            # (hb, tq, d) f32
        # One lane-dense (tq, hb*d) store instead of hb masked d-lane stores.
        if hb == 1:
            slab = out[0]
        else:
            slab = jnp.concatenate([out[h] for h in range(hb)], axis=-1)
        o_ref[0] = slab.astype(o_ref.dtype)


# ----------------------------------------------------------------------------
# tiling helpers
# ----------------------------------------------------------------------------
def _choose_head_block(H, D):
    """Largest divisor hb of H with hb*D <= 1024 lanes, preferring lane-dense
    (hb*D % 128 == 0) so the output store path stays unmasked."""
    divisors = [h for h in range(H, 0, -1) if H % h == 0]
    for hb in divisors:
        if hb * D <= 1024 and (hb * D) % 128 == 0:
            return hb
    for hb in divisors:
        if hb * D <= 1024:
            return hb
    return 1


def _largest_tile(S, cap):
    """Largest multiple-of-128 divisor of S that is <= cap, or S itself."""
    if S <= cap:
        return S
    best = None
    t = 128
    while t <= cap:
        if S % t == 0:
            best = t
        t += 128
    return best if best is not None else S   # TODO(synk): ragged S fallback


def _step_vmem_bytes(hb, D, tq, tk, compute_bytes=2):
    """Rough per-step VMEM footprint: double-buffered q/k/v/out blocks,
    scratch, and the compiler's f32 (hb, tq, tk) score/prob temporaries."""
    blocks = 4 * hb * D * (2 * tq + 2 * tk + 2 * tk)      # q + k + v (f32, 2 bufs)
    blocks += 4 * hb * D * 2 * tq                          # output block (<= f32)
    scratch = hb * tq * (D * (4 + compute_bytes) + 8)      # acc + scaled-q + m, l
    temps = 3 * 4 * hb * tq * tk                           # s / p / mask temporaries
    return blocks + scratch + temps


def _choose_seq_tiles(S, hb, D, budget=40 * 1024 * 1024):
    """tq up to 1024, tk up to 512, shrunk until the per-step footprint fits
    the v7x-safe budget (v7x has 64 MiB VMEM per TensorCore)."""
    tq_cap, tk_cap = 1024, 512
    while True:
        tq = _largest_tile(S, tq_cap)
        tk = _largest_tile(S, tk_cap)
        if _step_vmem_bytes(hb, D, tq, tk) <= budget:
            return tq, tk
        if tq_cap <= 128 and tk_cap <= 128:
            return tq, tk
        if tq_cap >= 2 * tk_cap:
            tq_cap //= 2
        else:
            tk_cap //= 2


def _vmem_limit_bytes():
    """~3/4 of physical VMEM: ~96 MiB on v5e/v6e (128 MiB), ~48 MiB on v7x (64 MiB)."""
    try:
        cap = int(pltpu.get_tpu_info().vmem_capacity_bytes)
    except Exception:
        cap = 64 * 1024 * 1024
    return max(32 * 1024 * 1024, min(96 * 1024 * 1024, (cap * 3) // 4))


# ----------------------------------------------------------------------------
# wrapper
# ----------------------------------------------------------------------------
def self_attention(qkv, causal=False, softmax_scale=None, key_padding_mask=None,
                   compute_dtype=jnp.bfloat16, block_q=None, block_k=None):
    """Pallas flash-attention equivalent of SelfAttention.forward.

    qkv: (B, S, 3, H, D)
    key_padding_mask: optional (B, S) bool, True = keep.
    compute_dtype: MXU operand dtype (bf16 fast path; f32 for exact parity).
    returns: (B, S, H, D)
    """
    B, S, three, H, D = qkv.shape
    assert three == 3
    scale = float(softmax_scale) if softmax_scale is not None else 1.0 / math.sqrt(D)

    hb = _choose_head_block(H, D)
    tq, tk = _choose_seq_tiles(S, hb, D)
    if block_q is not None:
        tq = min(block_q, S)
    if block_k is not None:
        tk = min(block_k, S)

    # v7x has 2 TensorCores: keep at least 2 units of "parallel" grid work.
    if B * (H // hb) * (S // tq) < 2:
        if hb % 2 == 0 and ((hb // 2) * D) % 128 == 0:
            hb //= 2
        elif tq % 256 == 0:
            tq //= 2

    assert H % hb == 0 and S % tq == 0 and S % tk == 0
    assert tq == S or tq % 8 == 0
    assert tk == S or tk % 128 == 0

    # ONE wrapper transpose; q/k/v planes selected via index_maps below.
    qkv_t = jnp.transpose(qkv, (2, 0, 3, 1, 4))           # (3, B, H, S, D)

    def q_map(b, h, i, j):
        return (0, b, h, i, 0)

    if causal:
        # Clamp j to the diagonal block: above-diagonal K/V tiles map to a
        # repeated block index, so the pipeline skips their DMA entirely.
        def k_map(b, h, i, j):
            return (1, b, h, jnp.minimum(j, ((i + 1) * tq - 1) // tk), 0)

        def v_map(b, h, i, j):
            return (2, b, h, jnp.minimum(j, ((i + 1) * tq - 1) // tk), 0)
    else:
        def k_map(b, h, i, j):
            return (1, b, h, j, 0)

        def v_map(b, h, i, j):
            return (2, b, h, j, 0)

    in_specs = [
        pl.BlockSpec((1, 1, hb, tq, D), q_map),
        pl.BlockSpec((1, 1, hb, tk, D), k_map),
        pl.BlockSpec((1, 1, hb, tk, D), v_map),
    ]
    inputs = [qkv_t, qkv_t, qkv_t]

    has_mask = key_padding_mask is not None
    if has_mask:
        nkv = S // tk
        add_mask = jnp.where(key_padding_mask, 0.0, -10000.0).astype(jnp.float32)
        add_mask = add_mask.reshape(B, nkv, 1, tk)
        # j-resident: whole per-batch mask stays in VMEM across the KV loop.
        in_specs.append(pl.BlockSpec((1, nkv, 1, tk), lambda b, h, i, j: (b, 0, 0, 0)))
        inputs.append(add_mask)

    kernel = partial(_flash_kernel, scale=scale, causal=bool(causal),
                     has_mask=has_mask, hb=hb, d=D, tq=tq, tk=tk,
                     compute_dtype=compute_dtype)

    out = pl.pallas_call(
        kernel,
        out_shape=jax.ShapeDtypeStruct((B, S, H * D), qkv.dtype),
        grid=(B, H // hb, S // tq, S // tk),
        in_specs=in_specs,
        # lane-dense output: heads folded into the lane axis.
        out_specs=pl.BlockSpec((1, tq, hb * D), lambda b, h, i, j: (b, i, h)),
        scratch_shapes=[
            pltpu.VMEM((hb, tq, D), compute_dtype),        # pre-scaled/cast q
            pltpu.VMEM((hb, tq, 1), jnp.float32),          # running max m
            pltpu.VMEM((hb, tq, 1), jnp.float32),          # running denom l
            pltpu.VMEM((hb, tq, D), jnp.float32),          # output accumulator
        ],
        compiler_params=pltpu.CompilerParams(
            dimension_semantics=("parallel", "parallel", "parallel", "arbitrary"),
            vmem_limit_bytes=_vmem_limit_bytes()),
    )(*inputs)

    # (B, S, H*D) -> (B, S, H, D): a free reshape, no transpose.
    return out.reshape(B, S, H, D)


# ----------------------------------------------------------------------------
# pure-JAX reference (mirrors the PyTorch module)
# ----------------------------------------------------------------------------
def _reference(qkv, causal=False, softmax_scale=None, key_padding_mask=None):
    B, S, _, H, D = qkv.shape
    scale = softmax_scale if softmax_scale is not None else 1.0 / math.sqrt(D)
    q, k, v = qkv[:, :, 0], qkv[:, :, 1], qkv[:, :, 2]
    scores = jnp.einsum("bthd,bshd->bhts", q, k * scale)
    if key_padding_mask is not None:
        pad = jnp.where(key_padding_mask, 0.0, -10000.0).astype(scores.dtype)
        scores = scores + pad[:, None, None, :]
    if causal:
        cm = jnp.triu(jnp.full((S, S), -10000.0, scores.dtype), 1)
        scores = scores + cm
    attn = jax.nn.softmax(scores, axis=-1)
    return jnp.einsum("bhts,bshd->bthd", attn, v)


if __name__ == "__main__":
    key = jax.random.PRNGKey(0)
    B, S, H, D = 2, 8, 4, 32
    k1, k2 = jax.random.split(key)
    qkv = jax.random.normal(k1, (B, S, 3, H, D), dtype=jnp.float32)
    # deterministic key-padding mask: last two key positions of batch 1 masked
    key_padding_mask = jnp.ones((B, S), dtype=bool).at[1, -2:].set(False)

    # 1) default fast path (bf16 MXU operands, f32 accumulation), no mask.
    out = self_attention(qkv)
    jax.block_until_ready(out)
    ref = _reference(qkv)
    assert out.shape == (B, S, H, D)
    assert jnp.allclose(out, ref, atol=1e-1, rtol=1e-1)

    # 2) exact f32-MXU path: causal + padding mask, tight tolerance.
    out_c = self_attention(qkv, causal=True, key_padding_mask=key_padding_mask,
                           compute_dtype=jnp.float32)
    jax.block_until_ready(out_c)
    ref_c = _reference(qkv, causal=True, key_padding_mask=key_padding_mask)
    assert jnp.allclose(out_c, ref_c, atol=2e-5, rtol=2e-5)

    # 3) multi-tile exact path (small blocks forced): exercises the online
    #    softmax across KV tiles, the clamped causal K/V index_map, the
    #    boundary-vs-interior mask gating, and the j-resident padding mask.
    S2 = 512
    qkv2 = jax.random.normal(k2, (B, S2, 3, H, D), dtype=jnp.float32)
    mask2 = jnp.ones((B, S2), dtype=bool).at[1, -5:].set(False)
    out2 = self_attention(qkv2, causal=True, key_padding_mask=mask2,
                          compute_dtype=jnp.float32, block_q=128, block_k=128)
    jax.block_until_ready(out2)
    ref2 = _reference(qkv2, causal=True, key_padding_mask=mask2)
    assert out2.shape == (B, S2, H, D)
    assert jnp.allclose(out2, ref2, atol=1e-4, rtol=1e-4)

    # 4) default large-tile bf16 fast path on the same problem; exact
    #    semantics are already validated by (2)/(3), so a loose bf16 tolerance.
    out3 = self_attention(qkv2, causal=True, key_padding_mask=mask2)
    jax.block_until_ready(out3)
    assert jnp.allclose(out3, ref2, atol=1e-1, rtol=1e-1)

    print("KERNEL_OK")
</pallas_src>

<mosaic_0001>
module attributes {stable_mosaic.version = 11 : i64} {
  func.func @_flash_kernel(%arg0: i32, %arg1: i32, %arg2: i32, %arg3: i32, %arg4: memref<1x1x4x8x32xf32, #tpu.memory_space<vmem>>, %arg5: memref<1x1x4x8x32xf32, #tpu.memory_space<vmem>>, %arg6: memref<1x1x4x8x32xf32, #tpu.memory_space<vmem>>, %arg7: memref<1x8x128xf32, #tpu.memory_space<vmem>>, %arg8: memref<4x8x32xbf16, #tpu.memory_space<vmem>>, %arg9: memref<4x8x1xf32, #tpu.memory_space<vmem>>, %arg10: memref<4x8x1xf32, #tpu.memory_space<vmem>>, %arg11: memref<4x8x32xf32, #tpu.memory_space<vmem>>) attributes {dimension_semantics = [#tpu.dimension_semantics<parallel>, #tpu.dimension_semantics<parallel>, #tpu.dimension_semantics<parallel>, #tpu.dimension_semantics<arbitrary>], iteration_bounds = array<i64: 2, 1, 1, 1>, scalar_prefetch = 0 : i64, scratch_operands = 4 : i64, tpu.core_type = #tpu.core_type<tc>, window_params = [{transform_indices = @transform_0, window_bounds = array<i64: 1, 1, 4, 8, 32>}, {transform_indices = @transform_1, window_bounds = array<i64: 1, 1, 4, 8, 32>}, {transform_indices = @transform_2, window_bounds = array<i64: 1, 1, 4, 8, 32>}, {transform_indices = @transform_3, window_bounds = array<i64: 1, 8, 128>}]} {
    %c0_i32 = arith.constant 0 : i32
    %0 = arith.cmpi eq, %arg3, %c0_i32 : i32
    %1 = arith.extui %0 : i1 to i32
    %c0_i32_0 = arith.constant 0 : i32
    %2 = arith.cmpi ne, %1, %c0_i32_0 : i32
    scf.if %2 {
      %c0_36 = arith.constant 0 : index
      %c0_37 = arith.constant 0 : index
      %c0_38 = arith.constant 0 : index
      %c0_39 = arith.constant 0 : index
      %c0_40 = arith.constant 0 : index
      %37 = vector.load %arg4[%c0_36, %c0_37, %c0_38, %c0_39, %c0_40] : memref<1x1x4x8x32xf32, #tpu.memory_space<vmem>>, vector<1x1x4x8x32xf32>
      %38 = vector.shape_cast %37 : vector<1x1x4x8x32xf32> to vector<4x8x32xf32>
      %cst_41 = arith.constant 0.176776692 : f32
      %39 = vector.broadcast %cst_41 : f32 to vector<4x8x32xf32>
      %40 = arith.mulf %38, %39 : vector<4x8x32xf32>
      %41 = arith.truncf %40 : vector<4x8x32xf32> to vector<4x8x32xbf16>
      %c0_42 = arith.constant 0 : index
      %c0_43 = arith.constant 0 : index
      %c0_44 = arith.constant 0 : index
      %42 = vector.load %arg8[%c0_42, %c0_43, %c0_44] : memref<4x8x32xbf16, #tpu.memory_space<vmem>>, vector<4x8x32xbf16>
      tpu.vector_store %arg8[%c0_42, %c0_43, %c0_44], %41 {strides = array<i32>} : memref<4x8x32xbf16, #tpu.memory_space<vmem>>, vector<4x8x32xbf16>,
      %cst_45 = arith.constant 0xFF800000 : f32
      %43 = vector.broadcast %cst_45 : f32 to vector<4x8x1xf32>
      %c0_46 = arith.constant 0 : index
      %c0_47 = arith.constant 0 : index
      %c0_48 = arith.constant 0 : index
      %44 = vector.load %arg9[%c0_46, %c0_47, %c0_48] : memref<4x8x1xf32, #tpu.memory_space<vmem>>, vector<4x8x1xf32>
      tpu.vector_store %arg9[%c0_46, %c0_47, %c0_48], %43 {strides = array<i32>} : memref<4x8x1xf32, #tpu.memory_space<vmem>>, vector<4x8x1xf32>,
      %cst_49 = arith.constant 0.000000e+00 : f32
      %45 = vector.broadcast %cst_49 : f32 to vector<4x8x1xf32>
      %c0_50 = arith.constant 0 : index
      %c0_51 = arith.constant 0 : index
      %c0_52 = arith.constant 0 : index
      %46 = vector.load %arg10[%c0_50, %c0_51, %c0_52] : memref<4x8x1xf32, #tpu.memory_space<vmem>>, vector<4x8x1xf32>
      tpu.vector_store %arg10[%c0_50, %c0_51, %c0_52], %45 {strides = array<i32>} : memref<4x8x1xf32, #tpu.memory_space<vmem>>, vector<4x8x1xf32>,
      %cst_53 = arith.constant 0.000000e+00 : f32
      %47 = vector.broadcast %cst_53 : f32 to vector<4x8x32xf32>
      %c0_54 = arith.constant 0 : index
      %c0_55 = arith.constant 0 : index
      %c0_56 = arith.constant 0 : index
      %48 = vector.load %arg11[%c0_54, %c0_55, %c0_56] : memref<4x8x32xf32, #tpu.memory_space<vmem>>, vector<4x8x32xf32>
      tpu.vector_store %arg11[%c0_54, %c0_55, %c0_56], %47 {strides = array<i32>} : memref<4x8x32xf32, #tpu.memory_space<vmem>>, vector<4x8x32xf32>,
    } else {
    }
    %c0 = arith.constant 0 : index
    %c0_1 = arith.constant 0 : index
    %c0_2 = arith.constant 0 : index
    %3 = vector.load %arg8[%c0, %c0_1, %c0_2] : memref<4x8x32xbf16, #tpu.memory_space<vmem>>, vector<4x8x32xbf16>
    %c0_3 = arith.constant 0 : index
    %c0_4 = arith.constant 0 : index
    %c0_5 = arith.constant 0 : index
    %c0_6 = arith.constant 0 : index
    %c0_7 = arith.constant 0 : index
    %4 = vector.load %arg5[%c0_3, %c0_4, %c0_5, %c0_6, %c0_7] : memref<1x1x4x8x32xf32, #tpu.memory_space<vmem>>, vector<1x1x4x8x32xf32>
    %5 = vector.shape_cast %4 : vector<1x1x4x8x32xf32> to vector<4x8x32xf32>
    %6 = arith.truncf %5 : vector<4x8x32xf32> to vector<4x8x32xbf16>
    %c0_8 = arith.constant 0 : index
    %c0_9 = arith.constant 0 : index
    %c0_10 = arith.constant 0 : index
    %c0_11 = arith.constant 0 : index
    %c0_12 = arith.constant 0 : index
    %7 = vector.load %arg6[%c0_8, %c0_9, %c0_10, %c0_11, %c0_12] : memref<1x1x4x8x32xf32, #tpu.memory_space<vmem>>, vector<1x1x4x8x32xf32>
    %8 = vector.shape_cast %7 : vector<1x1x4x8x32xf32> to vector<4x8x32xf32>
    %9 = arith.truncf %8 : vector<4x8x32xf32> to vector<4x8x32xbf16>
    %cst = arith.constant dense<0.000000e+00> : vector<4x8x8xf32>
    %10 = tpu.matmul %3, %6, %cst {dimension_numbers = #tpu.dot_dimension_numbers<[2], [2], [1], [1], [0, 0, 0, 1, 1, 1], [0], [0]>} : vector<4x8x32xbf16>, vector<4x8x32xbf16>, vector<4x8x8xf32> -> vector<4x8x8xf32>
    %c0_13 = arith.constant 0 : index
    %c0_14 = arith.constant 0 : index
    %c0_15 = arith.constant 0 : index
    %11 = vector.load %arg9[%c0_13, %c0_14, %c0_15] : memref<4x8x1xf32, #tpu.memory_space<vmem>>, vector<4x8x1xf32>
    %cst_16 = arith.constant dense<0xFF800000> : vector<4x8xf32>
    %12 = vector.multi_reduction <maximumf>, %10, %cst_16 [2] : vector<4x8x8xf32> to vector<4x8xf32>
    %13 = vector.shape_cast %12 : vector<4x8xf32> to vector<4x8x1xf32>
    %14 = arith.maximumf %11, %13 : vector<4x8x1xf32>
    %15 = arith.subf %11, %14 : vector<4x8x1xf32>
    %16 = math.exp %15 : vector<4x8x1xf32>
    %17 = vector.broadcast %14 : vector<4x8x1xf32> to vector<4x8x8xf32>
    %18 = arith.subf %10, %17 : vector<4x8x8xf32>
    %19 = math.exp %18 : vector<4x8x8xf32>
    %c0_17 = arith.constant 0 : index
    %c0_18 = arith.constant 0 : index
    %c0_19 = arith.constant 0 : index
    %20 = vector.load %arg10[%c0_17, %c0_18, %c0_19] : memref<4x8x1xf32, #tpu.memory_space<vmem>>, vector<4x8x1xf32>
    %21 = arith.mulf %16, %20 : vector<4x8x1xf32>
    %cst_20 = arith.constant dense<0.000000e+00> : vector<4x8xf32>
    %22 = vector.multi_reduction <add>, %19, %cst_20 [2] : vector<4x8x8xf32> to vector<4x8xf32>
    %23 = vector.shape_cast %22 : vector<4x8xf32> to vector<4x8x1xf32>
    %24 = arith.addf %21, %23 : vector<4x8x1xf32>
    %c0_21 = arith.constant 0 : index
    %c0_22 = arith.constant 0 : index
    %c0_23 = arith.constant 0 : index
    %25 = vector.load %arg10[%c0_21, %c0_22, %c0_23] : memref<4x8x1xf32, #tpu.memory_space<vmem>>, vector<4x8x1xf32>
    tpu.vector_store %arg10[%c0_21, %c0_22, %c0_23], %24 {strides = array<i32>} : memref<4x8x1xf32, #tpu.memory_space<vmem>>, vector<4x8x1xf32>,
    %26 = arith.truncf %19 : vector<4x8x8xf32> to vector<4x8x8xbf16>
    %cst_24 = arith.constant dense<0.000000e+00> : vector<4x8x32xf32>
    %27 = tpu.matmul %26, %9, %cst_24 {dimension_numbers = #tpu.dot_dimension_numbers<[2], [1], [1], [2], [0, 0, 0, 1, 1, 2], [0], [0]>} : vector<4x8x8xbf16>, vector<4x8x32xbf16>, vector<4x8x32xf32> -> vector<4x8x32xf32>
    %c0_25 = arith.constant 0 : index
    %c0_26 = arith.constant 0 : index
    %c0_27 = arith.constant 0 : index
    %28 = vector.load %arg11[%c0_25, %c0_26, %c0_27] : memref<4x8x32xf32, #tpu.memory_space<vmem>>, vector<4x8x32xf32>
    %29 = vector.broadcast %16 : vector<4x8x1xf32> to vector<4x8x32xf32>
    %30 = arith.mulf %29, %28 : vector<4x8x32xf32>
    %31 = arith.addf %30, %27 : vector<4x8x32xf32>
    %c0_28 = arith.constant 0 : index
    %c0_29 = arith.constant 0 : index
    %c0_30 = arith.constant 0 : index
    %32 = vector.load %arg11[%c0_28, %c0_29, %c0_30] : memref<4x8x32xf32, #tpu.memory_space<vmem>>, vector<4x8x32xf32>
    tpu.vector_store %arg11[%c0_28, %c0_29, %c0_30], %31 {strides = array<i32>} : memref<4x8x32xf32, #tpu.memory_space<vmem>>, vector<4x8x32xf32>,
    %c0_31 = arith.constant 0 : index
    %c0_32 = arith.constant 0 : index
    %c0_33 = arith.constant 0 : index
    %33 = vector.load %arg9[%c0_31, %c0_32, %c0_33] : memref<4x8x1xf32, #tpu.memory_space<vmem>>, vector<4x8x1xf32>
    tpu.vector_store %arg9[%c0_31, %c0_32, %c0_33], %14 {strides = array<i32>} : memref<4x8x1xf32, #tpu.memory_space<vmem>>, vector<4x8x1xf32>,
    %c0_i32_34 = arith.constant 0 : i32
    %34 = arith.cmpi eq, %arg3, %c0_i32_34 : i32
    %35 = arith.extui %34 : i1 to i32
    %c0_i32_35 = arith.constant 0 : i32
    %36 = arith.cmpi ne, %35, %c0_i32_35 : i32
    scf.if %36 {
      %c0_36 = arith.constant 0 : index
      %c0_37 = arith.constant 0 : index
      %c0_38 = arith.constant 0 : index
      %37 = vector.load %arg10[%c0_36, %c0_37, %c0_38] : memref<4x8x1xf32, #tpu.memory_space<vmem>>, vector<4x8x1xf32>
      %38 = tpu.reciprocal %37 {approx = true} : vector<4x8x1xf32> -> vector<4x8x1xf32>
      %39 = arith.mulf %37, %38 : vector<4x8x1xf32>
      %cst_39 = arith.constant 2.000000e+00 : f32
      %40 = vector.broadcast %cst_39 : f32 to vector<4x8x1xf32>
      %41 = arith.subf %40, %39 : vector<4x8x1xf32>
      %42 = arith.mulf %38, %41 : vector<4x8x1xf32>
      %c0_40 = arith.constant 0 : index
      %c0_41 = arith.constant 0 : index
      %c0_42 = arith.constant 0 : index
      %43 = vector.load %arg11[%c0_40, %c0_41, %c0_42] : memref<4x8x32xf32, #tpu.memory_space<vmem>>, vector<4x8x32xf32>
      %44 = vector.broadcast %42 : vector<4x8x1xf32> to vector<4x8x32xf32>
      %45 = arith.mulf %43, %44 : vector<4x8x32xf32>
      %46 = vector.extract_strided_slice %45 {offsets = [0, 0, 0], sizes = [1, 8, 32], strides = [1, 1, 1]} : vector<4x8x32xf32> to vector<1x8x32xf32>
      %47 = vector.shape_cast %46 : vector<1x8x32xf32> to vector<8x32xf32>
      %48 = vector.extract_strided_slice %45 {offsets = [1, 0, 0], sizes = [1, 8, 32], strides = [1, 1, 1]} : vector<4x8x32xf32> to vector<1x8x32xf32>
      %49 = vector.shape_cast %48 : vector<1x8x32xf32> to vector<8x32xf32>
      %50 = vector.extract_strided_slice %45 {offsets = [2, 0, 0], sizes = [1, 8, 32], strides = [1, 1, 1]} : vector<4x8x32xf32> to vector<1x8x32xf32>
      %51 = vector.shape_cast %50 : vector<1x8x32xf32> to vector<8x32xf32>
      %52 = vector.extract_strided_slice %45 {offsets = [3, 0, 0], sizes = [1, 8, 32], strides = [1, 1, 1]} : vector<4x8x32xf32> to vector<1x8x32xf32>
      %53 = vector.shape_cast %52 : vector<1x8x32xf32> to vector<8x32xf32>
      %54 = tpu.concatenate %47, %49, %51, %53 in 1 : vector<8x32xf32>, vector<8x32xf32>, vector<8x32xf32>, vector<8x32xf32> -> vector<8x128xf32>
      %c0_43 = arith.constant 0 : index
      %c0_44 = arith.constant 0 : index
      %c0_45 = arith.constant 0 : index
      %55 = vector.load %arg7[%c0_43, %c0_44, %c0_45] : memref<1x8x128xf32, #tpu.memory_space<vmem>>, vector<1x8x128xf32>
      %56 = vector.shape_cast %55 : vector<1x8x128xf32> to vector<8x128xf32>
      %57 = vector.shape_cast %54 : vector<8x128xf32> to vector<1x8x128xf32>
      tpu.vector_store %arg7[%c0_43, %c0_44, %c0_45], %57 {strides = array<i32>} : memref<1x8x128xf32, #tpu.memory_space<vmem>>, vector<1x8x128xf32>,
    } else {
    }
    return
  }
  func.func @transform_0(%arg0: i32, %arg1: i32, %arg2: i32, %arg3: i32) -> (i32, i32, i32, i32, i32) {
    %c0_i32 = arith.constant 0 : i32
    %c0_i32_0 = arith.constant 0 : i32
    %c0_i32_1 = arith.constant 0 : i32
    return %c0_i32, %arg0, %arg1, %arg2, %c0_i32_0 : i32, i32, i32, i32, i32
  }
  func.func @transform_1(%arg0: i32, %arg1: i32, %arg2: i32, %arg3: i32) -> (i32, i32, i32, i32, i32) {
    %c1_i32 = arith.constant 1 : i32
    %c0_i32 = arith.constant 0 : i32
    %c0_i32_0 = arith.constant 0 : i32
    return %c1_i32, %arg0, %arg1, %arg3, %c0_i32 : i32, i32, i32, i32, i32
  }
  func.func @transform_2(%arg0: i32, %arg1: i32, %arg2: i32, %arg3: i32) -> (i32, i32, i32, i32, i32) {
    %c2_i32 = arith.constant 2 : i32
    %c0_i32 = arith.constant 0 : i32
    %c0_i32_0 = arith.constant 0 : i32
    return %c2_i32, %arg0, %arg1, %arg3, %c0_i32 : i32, i32, i32, i32, i32
  }
  func.func @transform_3(%arg0: i32, %arg1: i32, %arg2: i32, %arg3: i32) -> (i32, i32, i32) {
    %c0_i32 = arith.constant 0 : i32
    return %arg0, %arg2, %arg1 : i32, i32, i32
  }
}

</mosaic_0001>

<llo_original>
// kernel: tpu_custom_call.1
$region0: #{tpu_custom_call.1}
  #allocation0 [shape = 'u32[]', space=smem, size = 0x4, offset = 0x4, fixed_abs, tag = 'smem constant byte address 0x4 - core index']
  #allocation1 [shape = 'u32[72,128]{1,0:T(1,128)}', space=vmem, size = 0x9000, scoped, tag = 'internal scratch']
  #allocation2 [shape = 'bf16[4,8,32]{2,1,0:T(8,128)(2,1)}', space=vmem, size = 0x2000, scoped, tag = 'scratch operand']
  #allocation3 [shape = 'f32[4,8,1]{2,1,0:T(8,128)}', space=vmem, size = 0x4000, scoped, tag = 'scratch operand']
  #allocation4 [shape = 'f32[4,8,1]{2,1,0:T(8,128)}', space=vmem, size = 0x4000, scoped, tag = 'scratch operand']
  #allocation5 [shape = 'f32[4,8,32]{2,1,0:T(8,128)}', space=vmem, size = 0x4000, scoped, tag = 'scratch operand']
  %s0 = inlined_call_operand.hbm [shape: f32[3,2,4,8,32], index: 0, kind: input, shape index: {}]
  %s1 = inlined_call_operand.hbm [shape: f32[3,2,4,8,32], index: 1, kind: input, shape index: {}]
  %s2 = inlined_call_operand.hbm [shape: f32[3,2,4,8,32], index: 2, kind: input, shape index: {}]
  %s3 = inlined_call_operand.hbm [shape: f32[2,8,128], index: 3, kind: output, shape index: {}]
  %s4 = sld [smem:[#allocation0]]
  $region65: #{tpu_custom_call.1} parent=0
    _
  %s6 = ssub.s32 1, %s4
  %s7 = scalar_select 0, %s6, %s4
  $region1: #{tpu_custom_call.1} parent=0
    #allocation6 [shape = 'u8[32768]{0}', space=vmem, size = 0x8000, scoped, tag = 'input window, operand 0']
    #allocation7 [shape = 's32[2]{0}', space=sflag, size = 0x8, scoped, tag = 'scoped memory for tpu_custom_call.1']
    #allocation8 [shape = 's32[2]{0}', space=sflag, size = 0x8, scoped, tag = 'scoped memory for tpu_custom_call.1']
    #allocation9 [shape = 'u8[32768]{0}', space=vmem, size = 0x8000, scoped, tag = 'input window, operand 1']
    #allocation10 [shape = 's32[2]{0}', space=sflag, size = 0x8, scoped, tag = 'scoped memory for tpu_custom_call.1']
    #allocation11 [shape = 'u8[32768]{0}', space=vmem, size = 0x8000, scoped, tag = 'input window, operand 2']
    #allocation12 [shape = 'u8[8192]{0}', space=vmem, size = 0x2000, scoped, tag = 'output window, operand 0']
    %8 = vsyncpa [#allocation7], 0
    %s9 = scalar_lea.sflag [#allocation7], 1
    %10 = vsyncpa %s9, 0
    %11 = vsyncpa [#allocation10], 0
    %s12 = scalar_lea.sflag [#allocation10], 1
    %13 = vsyncpa %s12, 0
    %14 = vsyncpa [#allocation8], 0
    %s15 = scalar_lea.sflag [#allocation8], 1
    %16 = vsyncpa %s15, 0
    loop: start=0, step=1, limit=4
    $region2: #{tpu_custom_call.1} parent=1 // loop_pre_header
      _
    $region3: #{tpu_custom_call.1} parent=1 // loop_header
      %s18 = sphi 0, %s22
      %p19 = scmp.ge.s32.totalorder %s18, 4
      %s25 = sphi 0, %s51
      %s26 = sphi 0, %s47
      %s27 = sphi 0, %s43
      %s28 = sphi 0, %s39
      %s29 = sphi 0, %s25
      %s30 = sphi 0, %s26
      %s31 = sphi 0, %s27
      %s32 = sphi 0, %s28
      %s33 = sphi 0, %s29
      %s34 = sphi 0, %s30
      %s35 = sphi 0, %s31
      %s36 = sphi 0, %s32
      %s58 = sphi 0, %s60
      %s61 = sphi 0, %s58
      %s62 = sphi 0, %s61
      %s78 = sphi 0, %s62
      %s88 = sphi 0, %s90
      %s91 = sphi 0, %s88
      %s92 = sphi 0, %s91
      %s108 = sphi 0, %s92
      %s118 = sphi 0, %s120
      %s121 = sphi 0, %s118
      %s122 = sphi 0, %s121
      %s138 = sphi 0, %s122
      %s148 = sphi 0, %s150
      %s151 = sphi 0, %s148
      %s152 = sphi 0, %s151
      %s168 = sphi 0, %s152
    $region4: #{tpu_custom_call.1} parent=1 // loop_header_branch
      %21 = sbr.rel (%p19) target = $region8
    $region5: #{tpu_custom_call.1} parent=1 // loop_body
      %s23 = ssub.s32 %s18, 1
      %s24 = ssub.s32 %s18, 2
      %s37 = sadd.s32 1, %s28
      %p38 = scmp.ge.s32.totalorder %s37, 1
      %s39 = scalar_select %p38, 0, %s37
      %s40 = sadd.s32 1, %s27
      %s41 = scalar_select %p38, %s40, %s27
      %p42 = scmp.ge.s32.totalorder %s41, 1
      %s43 = scalar_select %p42, 0, %s41
      %s44 = sadd.s32 1, %s26
      %s45 = scalar_select %p42, %s44, %s26
      %p46 = scmp.ge.s32.totalorder %s45, 1
      %s47 = scalar_select %p46, 0, %s45
      %s48 = sadd.s32 1, %s25
      %s49 = scalar_select %p46, %s48, %s25
      %p50 = scmp.ge.s32.totalorder %s49, 2
      %s51 = scalar_select %p50, 0, %s49
      %s52 = ssub.s32 %s25, %s51
      %s53 = ssub.s32 %s26, %s47
      %s54 = sor.u32 %s52, %s53
      %s55 = ssub.s32 %s27, %s43
      %s56 = sor.u32 %s54, %s55
      %p57 = scmp.eq.s32.totalorder %s56, 0
      %s59 = sadd.s32 %s58, 1
      %s60 = scalar_select %p57, %s58, %s59
      %p63 = pneg %p57
      %p64 = scmp.eq.s32.totalorder %s18, 1
      %p65 = por %p63, %p64
      %p66 = scmp.ne.s32.totalorder %s58, %s61
      %p67 = scmp.eq.s32.totalorder %s18, 0
      %p68 = por %p66, %p67
      %p69 = scmp.ne.s32.totalorder %s58, %s61
      %p70 = scmp.eq.s32.totalorder %s23, 1
      %p71 = por %p69, %p70
      %p72 = scmp.ne.s32.totalorder %s61, %s62
      %p73 = scmp.eq.s32.totalorder %s23, 0
      %p74 = por %p72, %p73
      %p75 = scmp.ne.s32.totalorder %s61, %s62
      %p76 = scmp.eq.s32.totalorder %s24, 1
      %p77 = por %p75, %p76
      %p79 = scmp.ne.s32.totalorder %s62, %s78
      %p80 = scmp.eq.s32.totalorder %s24, 0
      %p81 = por %p79, %p80
      %s82 = ssub.s32 %s25, %s51
      %s83 = ssub.s32 %s26, %s47
      %s84 = sor.u32 %s82, %s83
      %s85 = ssub.s32 %s28, %s39
      %s86 = sor.u32 %s84, %s85
      %p87 = scmp.eq.s32.totalorder %s86, 0
      %s89 = sadd.s32 %s88, 1
      %s90 = scalar_select %p87, %s88, %s89
      %p93 = pneg %p87
      %p94 = scmp.eq.s32.totalorder %s18, 1
      %p95 = por %p93, %p94
      %p96 = scmp.ne.s32.totalorder %s88, %s91
      %p97 = scmp.eq.s32.totalorder %s18, 0
      %p98 = por %p96, %p97
      %p99 = scmp.ne.s32.totalorder %s88, %s91
      %p100 = scmp.eq.s32.totalorder %s23, 1
      %p101 = por %p99, %p100
      %p102 = scmp.ne.s32.totalorder %s91, %s92
      %p103 = scmp.eq.s32.totalorder %s23, 0
      %p104 = por %p102, %p103
      %p105 = scmp.ne.s32.totalorder %s91, %s92
      %p106 = scmp.eq.s32.totalorder %s24, 1
      %p107 = por %p105, %p106
      %p109 = scmp.ne.s32.totalorder %s92, %s108
      %p110 = scmp.eq.s32.totalorder %s24, 0
      %p111 = por %p109, %p110
      %s112 = ssub.s32 %s25, %s51
      %s113 = ssub.s32 %s26, %s47
      %s114 = sor.u32 %s112, %s113
      %s115 = ssub.s32 %s28, %s39
      %s116 = sor.u32 %s114, %s115
      %p117 = scmp.eq.s32.totalorder %s116, 0
      %s119 = sadd.s32 %s118, 1
      %s120 = scalar_select %p117, %s118, %s119
      %p123 = pneg %p117
      %p124 = scmp.eq.s32.totalorder %s18, 1
      %p125 = por %p123, %p124
      %p126 = scmp.ne.s32.totalorder %s118, %s121
      %p127 = scmp.eq.s32.totalorder %s18, 0
      %p128 = por %p126, %p127
      %p129 = scmp.ne.s32.totalorder %s118, %s121
      %p130 = scmp.eq.s32.totalorder %s23, 1
      %p131 = por %p129, %p130
      %p132 = scmp.ne.s32.totalorder %s121, %s122
      %p133 = scmp.eq.s32.totalorder %s23, 0
      %p134 = por %p132, %p133
      %p135 = scmp.ne.s32.totalorder %s121, %s122
      %p136 = scmp.eq.s32.totalorder %s24, 1
      %p137 = por %p135, %p136
      %p139 = scmp.ne.s32.totalorder %s122, %s138
      %p140 = scmp.eq.s32.totalorder %s24, 0
      %p141 = por %p139, %p140
      %s142 = ssub.s32 %s25, %s51
      %s143 = ssub.s32 %s27, %s43
      %s144 = sor.u32 %s142, %s143
      %s145 = ssub.s32 %s26, %s47
      %s146 = sor.u32 %s144, %s145
      %p147 = scmp.eq.s32.totalorder %s146, 0
      %s149 = sadd.s32 %s148, 1
      %s150 = scalar_select %p147, %s148, %s149
      %p153 = pneg %p147
      %p154 = scmp.eq.s32.totalorder %s18, 1
      %p155 = por %p153, %p154
      %p156 = scmp.ne.s32.totalorder %s148, %s151
      %p157 = scmp.eq.s32.totalorder %s18, 0
      %p158 = por %p156, %p157
      %p159 = scmp.ne.s32.totalorder %s148, %s151
      %p160 = scmp.eq.s32.totalorder %s23, 1
      %p161 = por %p159, %p160
      %p162 = scmp.ne.s32.totalorder %s151, %s152
      %p163 = scmp.eq.s32.totalorder %s23, 0
      %p164 = por %p162, %p163
      %p165 = scmp.ne.s32.totalorder %s151, %s152
      %p166 = scmp.eq.s32.totalorder %s24, 1
      %p167 = por %p165, %p166
      %p169 = scmp.ne.s32.totalorder %s152, %s168
      %p170 = scmp.eq.s32.totalorder %s24, 0
      %p171 = por %p169, %p170
      %p172 = scmp.le.s32.totalorder 1, %s18
      %p173 = scmp.lt.s32.totalorder %s18, 3
      %p174 = pnand %p172, %p173
      %p175 = pneg %p174
      // Predicated region
      $region9: #{tpu_custom_call.1} parent=5 // pred_check
        _
      $region10: #{tpu_custom_call.1} parent=5 // pred_check_branch
        %177 = sbr.rel (%p174) target = $region12
      $region11: #{tpu_custom_call.1} parent=5 // pred_region
        %s178 = ssub.s32 %s18, 1
      $region12: #{tpu_custom_call.1} parent=5 // pred_fallthru
        _
      %p179 = scmp.lt.s32.totalorder %s18, 2
      // Predicated region
      $region13: #{tpu_custom_call.1} parent=5 // pred_check
        %p180 = pneg %p179
      $region14: #{tpu_custom_call.1} parent=5 // pred_check_branch
        %182 = sbr.rel (%p180) target = $region16
      $region15: #{tpu_custom_call.1} parent=5 // pred_region
        // Predicated region
        $region17: #{tpu_custom_call.1} parent=15 // pred_check
          %p183 = pneg %p68
        $region18: #{tpu_custom_call.1} parent=15 // pred_check_branch
          %185 = sbr.rel (%p183) target = $region20
        $region19: #{tpu_custom_call.1} parent=15 // pred_region
          %s186 = sand.u32 %s58, 1
          %s187 = scalar_lea.sflag [#allocation7], %s186
          %s188 = sand.u32 %s58, 1
          %s189 = smul.addr %s188, 32
          %s190 = scalar_lea.vmem [#allocation6], %s189
          %s191 = smul.u32 4, %s26
          %193 = vsyncadd %s187, 0
          %s194 = sadd.s32 %s27, %s191
          %s195 = smul.addr %s25, 4
          %s196 = sadd.s32 %s194, %s195
          %s197 = smul.addr %s196, 8
          %s198 = scalar_lea.hbm %s0, %s197
          %s199 = sshll.u32 %s198, 4
          %s200 = int_to_ptr.hbm [resolvable:$true] %s199
          %s201 = sshll.u32 %s190, 4
          %s202 = int_to_ptr.vmem [resolvable:$true] %s201
          %207 = dma.hbm_to_vmem [thread:$0]  %s200, 512, %s202, %s187, 128, 128, 8
        $region20: #{tpu_custom_call.1} parent=15 // pred_fallthru
          _
        // Predicated region
        $region21: #{tpu_custom_call.1} parent=15 // pred_check
          %p208 = pneg %p98
        $region22: #{tpu_custom_call.1} parent=15 // pred_check_branch
          %210 = sbr.rel (%p208) target = $region24
        $region23: #{tpu_custom_call.1} parent=15 // pred_region
          %s211 = sand.u32 %s18, 1
          %s212 = scalar_lea.sflag [#allocation10], %s211
          %s213 = sand.u32 %s88, 1
          %s214 = smul.addr %s213, 32
          %s215 = scalar_lea.vmem [#allocation9], %s214
          %s216 = smul.u32 4, %s26
          %218 = vsyncadd %s212, 0
          %s219 = sadd.s32 %s28, %s216
          %s220 = smul.addr %s25, 4
          %s221 = sadd.s32 %s219, %s220
          %s222 = sadd.s32 %s221, 8
          %s223 = smul.addr %s222, 8
          %s224 = scalar_lea.hbm %s1, %s223
          %s225 = sshll.u32 %s224, 4
          %s226 = int_to_ptr.hbm [resolvable:$true] %s225
          %s227 = sshll.u32 %s215, 4
          %s228 = int_to_ptr.vmem [resolvable:$true] %s227
          %233 = dma.hbm_to_vmem [thread:$0]  %s226, 512, %s228, %s212, 128, 128, 8
        $region24: #{tpu_custom_call.1} parent=15 // pred_fallthru
          _
        // Predicated region
        $region25: #{tpu_custom_call.1} parent=15 // pred_check
          %p234 = pneg %p128
        $region26: #{tpu_custom_call.1} parent=15 // pred_check_branch
          %236 = sbr.rel (%p234) target = $region28
        $region27: #{tpu_custom_call.1} parent=15 // pred_region
          %s237 = sand.u32 %s18, 1
          %s238 = scalar_lea.sflag [#allocation10], %s237
          %s239 = sand.u32 %s118, 1
          %s240 = smul.addr %s239, 32
          %s241 = scalar_lea.vmem [#allocation11], %s240
          %s242 = smul.u32 4, %s26
          %244 = vsyncadd %s238, 0
          %s245 = sadd.s32 %s28, %s242
          %s246 = smul.addr %s25, 4
          %s247 = sadd.s32 %s245, %s246
          %s248 = sadd.s32 %s247, 16
          %s249 = smul.addr %s248, 8
          %s250 = scalar_lea.hbm %s2, %s249
          %s251 = sshll.u32 %s250, 4
          %s252 = int_to_ptr.hbm [resolvable:$true] %s251
          %s253 = sshll.u32 %s241, 4
          %s254 = int_to_ptr.vmem [resolvable:$true] %s253
          %259 = dma.hbm_to_vmem [thread:$0]  %s252, 512, %s254, %s238, 128, 128, 8
        $region28: #{tpu_custom_call.1} parent=15 // pred_fallthru
          _
      $region16: #{tpu_custom_call.1} parent=5 // pred_fallthru
        _
      %p260 = scmp.le.s32.totalorder 1, %s18
      %p261 = scmp.lt.s32.totalorder %s18, 3
      %p262 = pnand %p260, %p261
      %p263 = pneg %p262
      // Predicated region
      $region29: #{tpu_custom_call.1} parent=5 // pred_check
        _
      $region30: #{tpu_custom_call.1} parent=5 // pred_check_branch
        %265 = sbr.rel (%p262) target = $region32
      $region31: #{tpu_custom_call.1} parent=5 // pred_region
        %s266 = ssub.s32 %s18, 1
        %s267 = sand.u32 %s61, 1
        %s268 = scalar_lea.sflag [#allocation7], %s267
        %s269 = sand.u32 %s61, 1
        %s270 = smul.addr %s269, 32
        %s271 = scalar_lea.vmem [#allocation6], %s270
        // Predicated region
        $region33: #{tpu_custom_call.1} parent=31 // pred_check
          %p272 = pneg %p74
        $region34: #{tpu_custom_call.1} parent=31 // pred_check_branch
          %274 = sbr.rel (%p272) target = $region36
        $region35: #{tpu_custom_call.1} parent=31 // pred_region
          %276 = dma.done %s268, 512
        $region36: #{tpu_custom_call.1} parent=31 // pred_fallthru
          _
        %s277 = sand.u32 %s23, 1
        %s278 = scalar_lea.sflag [#allocation10], %s277
        %s279 = sand.u32 %s91, 1
        %s280 = smul.addr %s279, 32
        %s281 = scalar_lea.vmem [#allocation9], %s280
        // Predicated region
        $region37: #{tpu_custom_call.1} parent=31 // pred_check
          %p282 = pneg %p104
        $region38: #{tpu_custom_call.1} parent=31 // pred_check_branch
          %284 = sbr.rel (%p282) target = $region40
        $region39: #{tpu_custom_call.1} parent=31 // pred_region
          %286 = dma.done %s278, 512
        $region40: #{tpu_custom_call.1} parent=31 // pred_fallthru
          _
        %s287 = sand.u32 %s23, 1
        %s288 = scalar_lea.sflag [#allocation10], %s287
        %s289 = sand.u32 %s121, 1
        %s290 = smul.addr %s289, 32
        %s291 = scalar_lea.vmem [#allocation11], %s290
        // Predicated region
        $region41: #{tpu_custom_call.1} parent=31 // pred_check
          %p292 = pneg %p134
        $region42: #{tpu_custom_call.1} parent=31 // pred_check_branch
          %294 = sbr.rel (%p292) target = $region44
        $region43: #{tpu_custom_call.1} parent=31 // pred_region
          %296 = dma.done %s288, 512
        $region44: #{tpu_custom_call.1} parent=31 // pred_fallthru
          _
        %s297 = sand.u32 %s61, 1
        %s298 = scalar_lea.sflag [#allocation7], %s297
        %s299 = sand.u32 %s61, 1
        %s300 = smul.addr %s299, 32
        %s301 = scalar_lea.vmem [#allocation6], %s300
        %p302 = pneg %p74
        %p303 = pneg %p71
        %s304 = sand.u32 %s23, 1
        %s305 = scalar_lea.sflag [#allocation10], %s304
        %s306 = sand.u32 %s91, 1
        %s307 = smul.addr %s306, 32
        %s308 = scalar_lea.vmem [#allocation9], %s307
        %p309 = pneg %p104
        %p310 = pneg %p101
        %s311 = sand.u32 %s23, 1
        %s312 = scalar_lea.sflag [#allocation10], %s311
        %s313 = sand.u32 %s121, 1
        %s314 = smul.addr %s313, 32
        %s315 = scalar_lea.vmem [#allocation11], %s314
        %p316 = pneg %p134
        %p317 = pneg %p131
        %p318 = pneg %p164
        %p319 = pneg %p161
        %s320 = sand.u32 %s151, 1
        %s321 = scalar_lea.sflag [#allocation8], %s320
        %s322 = sand.u32 %s151, 1
        %s323 = smul.addr %s322, 8
        %s324 = scalar_lea.vmem [#allocation12], %s323
        %s325 = smul.u32 4, %s30
        %s326 = smul.u32 4, %s30
        %s327 = smul.u32 4, %s30
        %p329 = scmp.eq.s32.totalorder %s32, 0
        // Predicated region
        $region45: #{tpu_custom_call.1} parent=31 // pred_check
          %p330 = pneg %p329
        $region46: #{tpu_custom_call.1} parent=31 // pred_check_branch
          %332 = sbr.rel (%p330) target = $region48
        $region47: #{tpu_custom_call.1} parent=31 // pred_region
          %v333 = vld [vmem:[%s271] sm:$0xff]
          %v334 = vld [vmem:[%s271 + $0x8] sm:$0xff]
          %v335 = vld [vmem:[%s271 + $0x10] sm:$0xff]
          %v336 = vld [vmem:[%s271 + $0x18] sm:$0xff]
          %v337 = vmul.f32 %v333, 0.17677669
          %v338 = vmul.f32 %v334, 0.17677669
          %v339 = vmul.f32 %v335, 0.17677669
          %v340 = vmul.f32 %v336, 0.17677669
          %v341 = vpack.c.bf16 %v337, %v337
          %v342 = vpack.c.bf16 %v338, %v338
          %v343 = vpack.c.bf16 %v339, %v339
          %v344 = vpack.c.bf16 %v340, %v340
          %vm345 = vcmask 257024
          %346 = vst.msk [vmem:[#allocation2] sm:$0xf] %vm345, %v341
          %347 = vst.msk [vmem:[#allocation2 + $0x4] sm:$0xf] %vm345, %v342
          %348 = vst.msk [vmem:[#allocation2 + $0x8] sm:$0xf] %vm345, %v343
          %349 = vst.msk [vmem:[#allocation2 + $0xc] sm:$0xf] %vm345, %v344
          %vm350 = vcmask 7168
          %351 = vst.msk [vmem:[#allocation3] sm:$0xff] %vm350, -inf
          %352 = vst.msk [vmem:[#allocation3 + $0x8] sm:$0xff] %vm350, -inf
          %353 = vst.msk [vmem:[#allocation3 + $0x10] sm:$0xff] %vm350, -inf
          %354 = vst.msk [vmem:[#allocation3 + $0x18] sm:$0xff] %vm350, -inf
          %355 = vst.msk [vmem:[#allocation4] sm:$0xff] %vm350, 0.0
          %356 = vst.msk [vmem:[#allocation4 + $0x8] sm:$0xff] %vm350, 0.0
          %357 = vst.msk [vmem:[#allocation4 + $0x10] sm:$0xff] %vm350, 0.0
          %358 = vst.msk [vmem:[#allocation4 + $0x18] sm:$0xff] %vm350, 0.0
          %vm359 = vcmask 261120
          %360 = vst.msk [vmem:[#allocation5] sm:$0xff] %vm359, 0.0
          %361 = vst.msk [vmem:[#allocation5 + $0x8] sm:$0xff] %vm359, 0.0
          %362 = vst.msk [vmem:[#allocation5 + $0x10] sm:$0xff] %vm359, 0.0
          %363 = vst.msk [vmem:[#allocation5 + $0x18] sm:$0xff] %vm359, 0.0
        $region48: #{tpu_custom_call.1} parent=31 // pred_fallthru
          _
        %v364 = vld [vmem:[#allocation2] sm:$0xf]
        %v365 = vld [vmem:[#allocation2 + $0x4] sm:$0xf]
        %v366 = vld [vmem:[#allocation2 + $0x8] sm:$0xf]
        %v367 = vld [vmem:[#allocation2 + $0xc] sm:$0xf]
        %v368 = vld [vmem:[%s281] sm:$0xff]
        %v369 = vld [vmem:[%s281 + $0x8] sm:$0xff]
        %v370 = vld [vmem:[%s281 + $0x10] sm:$0xff]
        %v371 = vld [vmem:[%s281 + $0x18] sm:$0xff]
        %v372 = vpack.c.bf16 %v368, %v368
        %v373 = vpack.c.bf16 %v369, %v369
        %v374 = vpack.c.bf16 %v370, %v370
        %v375 = vpack.c.bf16 %v371, %v371
        %v376 = vld [vmem:[%s291] sm:$0xff]
        %v377 = vld [vmem:[%s291 + $0x8] sm:$0xff]
        %v378 = vld [vmem:[%s291 + $0x10] sm:$0xff]
        %v379 = vld [vmem:[%s291 + $0x18] sm:$0xff]
        %v380 = vpack.c.bf16 %v376, %v376
        %v381 = vpack.c.bf16 %v377, %v377
        %v382 = vpack.c.bf16 %v378, %v378
        %v383 = vpack.c.bf16 %v379, %v379
        %vm384 = vcmask 261120
        %v386 = vsel %vm384, %v364, 0
        %v389 = vsel %vm384, %v372, 0
        %391 = vmatpush.bf16.xpose.msra.mxu0 0
        %392 = vmatpush.bf16.xpose.msra.mxu0 0
        %393 = vmatpush.bf16.xpose.msra.mxu0 0
        %394 = vmatpush.bf16.xpose.msra.mxu0 0
        %395 = vmatpush.bf16.xpose.msra.mxu0 0
        %396 = vmatpush.bf16.xpose.msra.mxu0 0
        %397 = vmatpush.bf16.xpose.msra.mxu0 0
        %398 = vmatpush.bf16.xpose.msra.mxu0 %v389
        %399 = vmatmul.bf16.gmra.mxu0 %v386
        %v400 = vpop.f32.mrf.mxu0
        %v401 = vadd.f32 0.0, %v400
        %v402 = vpop.f32.mrf.mxu0
        %403 = vdwg.mxu0
        %v405 = vsel %vm384, %v365, 0
        %v408 = vsel %vm384, %v373, 0
        %410 = vmatpush.bf16.xpose.msra.mxu0 0
        %411 = vmatpush.bf16.xpose.msra.mxu0 0
        %412 = vmatpush.bf16.xpose.msra.mxu0 0
        %413 = vmatpush.bf16.xpose.msra.mxu0 0
        %414 = vmatpush.bf16.xpose.msra.mxu0 0
        %415 = vmatpush.bf16.xpose.msra.mxu0 0
        %416 = vmatpush.bf16.xpose.msra.mxu0 0
        %417 = vmatpush.bf16.xpose.msra.mxu0 %v408
        %418 = vmatmul.bf16.gmra.mxu0 %v405
        %v419 = vpop.f32.mrf.mxu0
        %v420 = vadd.f32 0.0, %v419
        %v421 = vpop.f32.mrf.mxu0
        %422 = vdwg.mxu0
        %v424 = vsel %vm384, %v366, 0
        %v427 = vsel %vm384, %v374, 0
        %429 = vmatpush.bf16.xpose.msra.mxu0 0
        %430 = vmatpush.bf16.xpose.msra.mxu0 0
        %431 = vmatpush.bf16.xpose.msra.mxu0 0
        %432 = vmatpush.bf16.xpose.msra.mxu0 0
        %433 = vmatpush.bf16.xpose.msra.mxu0 0
        %434 = vmatpush.bf16.xpose.msra.mxu0 0
        %435 = vmatpush.bf16.xpose.msra.mxu0 0
        %436 = vmatpush.bf16.xpose.msra.mxu0 %v427
        %437 = vmatmul.bf16.gmra.mxu0 %v424
        %v438 = vpop.f32.mrf.mxu0
        %v439 = vadd.f32 0.0, %v438
        %v440 = vpop.f32.mrf.mxu0
        %441 = vdwg.mxu0
        %v443 = vsel %vm384, %v367, 0
        %v446 = vsel %vm384, %v375, 0
        %448 = vmatpush.bf16.xpose.msra.mxu0 0
        %449 = vmatpush.bf16.xpose.msra.mxu0 0
        %450 = vmatpush.bf16.xpose.msra.mxu0 0
        %451 = vmatpush.bf16.xpose.msra.mxu0 0
        %452 = vmatpush.bf16.xpose.msra.mxu0 0
        %453 = vmatpush.bf16.xpose.msra.mxu0 0
        %454 = vmatpush.bf16.xpose.msra.mxu0 0
        %455 = vmatpush.bf16.xpose.msra.mxu0 %v446
        %456 = vmatmul.bf16.gmra.mxu0 %v443
        %v457 = vpop.f32.mrf.mxu0
        %v458 = vadd.f32 0.0, %v457
        %v459 = vpop.f32.mrf.mxu0
        %460 = vdwg.mxu0
        %v461 = vld [vmem:[#allocation3] sm:$0xff]
        %v462 = vld [vmem:[#allocation3 + $0x8] sm:$0xff]
        %v463 = vld [vmem:[#allocation3 + $0x10] sm:$0xff]
        %v464 = vld [vmem:[#allocation3 + $0x18] sm:$0xff]
        %vm465 = vcmask 64512
        %v466 = vsel %vm465, %v401, -inf
        %467 = vmax.xlane.f32.xlu0 %v466
        %v468 = vpop.xlane.xlu0 %467
        %v469 = vsel %vm465, %v420, -inf
        %470 = vmax.xlane.f32.xlu0 %v469
        %v471 = vpop.xlane.xlu0 %470
        %v472 = vsel %vm465, %v439, -inf
        %473 = vmax.xlane.f32.xlu0 %v472
        %v474 = vpop.xlane.xlu0 %473
        %v475 = vsel %vm465, %v458, -inf
        %476 = vmax.xlane.f32.xlu0 %v475
        %v477 = vpop.xlane.xlu0 %476
        %v478 = vmax.f32 %v461, %v468
        %v479 = vmax.f32 %v462, %v471
        %v480 = vmax.f32 %v463, %v474
        %v481 = vmax.f32 %v464, %v477
        %v482 = vsub.f32 %v461, %v478
        %v483 = vsub.f32 %v462, %v479
        %v484 = vsub.f32 %v463, %v480
        %v485 = vsub.f32 %v464, %v481
        %v486 = vmul.f32 %v482, 1.442695
        %v487 = vpow.pop %v486
        %v488 = vmul.f32 %v483, 1.442695
        %v489 = vpow.pop %v488
        %v490 = vmul.f32 %v484, 1.442695
        %v491 = vpow.pop %v490
        %v492 = vmul.f32 %v485, 1.442695
        %v493 = vpow.pop %v492
        %495 = vset.pattern.permute.xlu0 0
        %496 = vperm.xlu0 %495, %v478
        %v497 = vpop.permute.xlu0 %496
        %500 = vset.pattern.permute.xlu0 0
        %501 = vperm.xlu0 %500, %v479
        %v502 = vpop.permute.xlu0 %501
        %505 = vset.pattern.permute.xlu0 0
        %506 = vperm.xlu0 %505, %v480
        %v507 = vpop.permute.xlu0 %506
        %510 = vset.pattern.permute.xlu0 0
        %511 = vperm.xlu0 %510, %v481
        %v512 = vpop.permute.xlu0 %511
        %v514 = vsub.f32 %v401, %v497
        %v515 = vsub.f32 %v420, %v502
        %v516 = vsub.f32 %v439, %v507
        %v517 = vsub.f32 %v458, %v512
        %v518 = vmul.f32 %v514, 1.442695
        %v519 = vpow.pop %v518
        %v520 = vmul.f32 %v515, 1.442695
        %v521 = vpow.pop %v520
        %v522 = vmul.f32 %v516, 1.442695
        %v523 = vpow.pop %v522
        %v524 = vmul.f32 %v517, 1.442695
        %v525 = vpow.pop %v524
        %v526 = vld [vmem:[#allocation4] sm:$0xff]
        %v527 = vld [vmem:[#allocation4 + $0x8] sm:$0xff]
        %v528 = vld [vmem:[#allocation4 + $0x10] sm:$0xff]
        %v529 = vld [vmem:[#allocation4 + $0x18] sm:$0xff]
        %v530 = vmul.f32 %v487, %v526
        %v531 = vmul.f32 %v489, %v527
        %v532 = vmul.f32 %v491, %v528
        %v533 = vmul.f32 %v493, %v529
        %v534 = vsel %vm465, %v519, 0.0
        %535 = vadd.xlane.f32.xlu0 %v534
        %v536 = vpop.xlane.xlu0 %535
        %v537 = vsel %vm465, %v521, 0.0
        %538 = vadd.xlane.f32.xlu0 %v537
        %v539 = vpop.xlane.xlu0 %538
        %v540 = vsel %vm465, %v523, 0.0
        %541 = vadd.xlane.f32.xlu0 %v540
        %v542 = vpop.xlane.xlu0 %541
        %v543 = vsel %vm465, %v525, 0.0
        %544 = vadd.xlane.f32.xlu0 %v543
        %v545 = vpop.xlane.xlu0 %544
        %v546 = vadd.f32 %v530, %v536
        %v547 = vadd.f32 %v531, %v539
        %v548 = vadd.f32 %v532, %v542
        %v549 = vadd.f32 %v533, %v545
        %vm550 = vcmask 7168
        %551 = vst.msk [vmem:[#allocation4] sm:$0xff] %vm550, %v546
        %552 = vst.msk [vmem:[#allocation4 + $0x8] sm:$0xff] %vm550, %v547
        %553 = vst.msk [vmem:[#allocation4 + $0x10] sm:$0xff] %vm550, %v548
        %554 = vst.msk [vmem:[#allocation4 + $0x18] sm:$0xff] %vm550, %v549
        %v555 = vpack.c.bf16 %v519, %v519
        %v556 = vpack.c.bf16 %v521, %v521
        %v557 = vpack.c.bf16 %v523, %v523
        %v558 = vpack.c.bf16 %v525, %v525
        %v560 = vsel %vm465, %v555, 0
        %vm562 = vcmask 1043456
        %v564 = vsel %vm562, %v380, 0
        %566 = vmatpush.bf16.msra.mxu0 0
        %567 = vmatpush.bf16.msra.mxu0 0
        %568 = vmatpush.bf16.msra.mxu0 0
        %569 = vmatpush.bf16.msra.mxu0 0
        %570 = vmatpush.bf16.msra.mxu0 0
        %571 = vmatpush.bf16.msra.mxu0 0
        %572 = vmatpush.bf16.msra.mxu0 0
        %573 = vmatpush.bf16.msra.mxu0 %v564
        %574 = vmatmul.bf16.gmra.mxu0 %v560
        %v575 = vpop.f32.mrf.mxu0
        %v576 = vadd.f32 0.0, %v575
        %v577 = vpop.f32.mrf.mxu0
        %578 = vdwg.mxu0
        %v580 = vsel %vm465, %v556, 0
        %v583 = vsel %vm562, %v381, 0
        %585 = vmatpush.bf16.msra.mxu0 0
        %586 = vmatpush.bf16.msra.mxu0 0
        %587 = vmatpush.bf16.msra.mxu0 0
        %588 = vmatpush.bf16.msra.mxu0 0
        %589 = vmatpush.bf16.msra.mxu0 0
        %590 = vmatpush.bf16.msra.mxu0 0
        %591 = vmatpush.bf16.msra.mxu0 0
        %592 = vmatpush.bf16.msra.mxu0 %v583
        %593 = vmatmul.bf16.gmra.mxu0 %v580
        %v594 = vpop.f32.mrf.mxu0
        %v595 = vadd.f32 0.0, %v594
        %v596 = vpop.f32.mrf.mxu0
        %597 = vdwg.mxu0
        %v599 = vsel %vm465, %v557, 0
        %v602 = vsel %vm562, %v382, 0
        %604 = vmatpush.bf16.msra.mxu0 0
        %605 = vmatpush.bf16.msra.mxu0 0
        %606 = vmatpush.bf16.msra.mxu0 0
        %607 = vmatpush.bf16.msra.mxu0 0
        %608 = vmatpush.bf16.msra.mxu0 0
        %609 = vmatpush.bf16.msra.mxu0 0
        %610 = vmatpush.bf16.msra.mxu0 0
        %611 = vmatpush.bf16.msra.mxu0 %v602
        %612 = vmatmul.bf16.gmra.mxu0 %v599
        %v613 = vpop.f32.mrf.mxu0
        %v614 = vadd.f32 0.0, %v613
        %v615 = vpop.f32.mrf.mxu0
        %616 = vdwg.mxu0
        %v618 = vsel %vm465, %v558, 0
        %v621 = vsel %vm562, %v383, 0
        %623 = vmatpush.bf16.msra.mxu0 0
        %624 = vmatpush.bf16.msra.mxu0 0
        %625 = vmatpush.bf16.msra.mxu0 0
        %626 = vmatpush.bf16.msra.mxu0 0
        %627 = vmatpush.bf16.msra.mxu0 0
        %628 = vmatpush.bf16.msra.mxu0 0
        %629 = vmatpush.bf16.msra.mxu0 0
        %630 = vmatpush.bf16.msra.mxu0 %v621
        %631 = vmatmul.bf16.gmra.mxu0 %v618
        %v632 = vpop.f32.mrf.mxu0
        %v633 = vadd.f32 0.0, %v632
        %v634 = vpop.f32.mrf.mxu0
        %635 = vdwg.mxu0
        %v636 = vld [vmem:[#allocation5] sm:$0xff]
        %v637 = vld [vmem:[#allocation5 + $0x8] sm:$0xff]
        %v638 = vld [vmem:[#allocation5 + $0x10] sm:$0xff]
        %v639 = vld [vmem:[#allocation5 + $0x18] sm:$0xff]
        %641 = vset.pattern.permute.xlu0 0
        %642 = vperm.xlu0 %641, %v487
        %v643 = vpop.permute.xlu0 %642
        %646 = vset.pattern.permute.xlu0 0
        %647 = vperm.xlu0 %646, %v489
        %v648 = vpop.permute.xlu0 %647
        %651 = vset.pattern.permute.xlu0 0
        %652 = vperm.xlu0 %651, %v491
        %v653 = vpop.permute.xlu0 %652
        %656 = vset.pattern.permute.xlu0 0
        %657 = vperm.xlu0 %656, %v493
        %v658 = vpop.permute.xlu0 %657
        %v660 = vmul.f32 %v643, %v636
        %v661 = vmul.f32 %v648, %v637
        %v662 = vmul.f32 %v653, %v638
        %v663 = vmul.f32 %v658, %v639
        %v664 = vadd.f32 %v660, %v576
        %v665 = vadd.f32 %v661, %v595
        %v666 = vadd.f32 %v662, %v614
        %v667 = vadd.f32 %v663, %v633
        %668 = vst.msk [vmem:[#allocation5] sm:$0xff] %vm384, %v664
        %669 = vst.msk [vmem:[#allocation5 + $0x8] sm:$0xff] %vm384, %v665
        %670 = vst.msk [vmem:[#allocation5 + $0x10] sm:$0xff] %vm384, %v666
        %671 = vst.msk [vmem:[#allocation5 + $0x18] sm:$0xff] %vm384, %v667
        %672 = vst.msk [vmem:[#allocation3] sm:$0xff] %vm550, %v478
        %673 = vst.msk [vmem:[#allocation3 + $0x8] sm:$0xff] %vm550, %v479
        %674 = vst.msk [vmem:[#allocation3 + $0x10] sm:$0xff] %vm550, %v480
        %675 = vst.msk [vmem:[#allocation3 + $0x18] sm:$0xff] %vm550, %v481
        // Predicated region
        $region49: #{tpu_custom_call.1} parent=31 // pred_check
          %p676 = pneg %p329
        $region50: #{tpu_custom_call.1} parent=31 // pred_check_branch
          %678 = sbr.rel (%p676) target = $region52
        $region51: #{tpu_custom_call.1} parent=31 // pred_region
          %v679 = vld [vmem:[#allocation4] sm:$0xff]
          %v680 = vld [vmem:[#allocation4 + $0x8] sm:$0xff]
          %v681 = vld [vmem:[#allocation4 + $0x10] sm:$0xff]
          %v682 = vld [vmem:[#allocation4 + $0x18] sm:$0xff]
          %v683 = vrcp.pop %v679
          %v684 = vrcp.pop %v680
          %v685 = vrcp.pop %v681
          %v686 = vrcp.pop %v682
          %v687 = vmul.f32 %v679, %v683
          %v688 = vmul.f32 %v680, %v684
          %v689 = vmul.f32 %v681, %v685
          %v690 = vmul.f32 %v682, %v686
          %v691 = vsub.f32 2.0, %v687
          %v692 = vsub.f32 2.0, %v688
          %v693 = vsub.f32 2.0, %v689
          %v694 = vsub.f32 2.0, %v690
          %v695 = vmul.f32 %v683, %v691
          %v696 = vmul.f32 %v684, %v692
          %v697 = vmul.f32 %v685, %v693
          %v698 = vmul.f32 %v686, %v694
          %v699 = vld [vmem:[#allocation5] sm:$0xff]
          %v700 = vld [vmem:[#allocation5 + $0x8] sm:$0xff]
          %v701 = vld [vmem:[#allocation5 + $0x10] sm:$0xff]
          %v702 = vld [vmem:[#allocation5 + $0x18] sm:$0xff]
          %704 = vset.pattern.permute.xlu0 0
          %705 = vperm.xlu0 %704, %v695
          %v706 = vpop.permute.xlu0 %705
          %709 = vset.pattern.permute.xlu0 0
          %710 = vperm.xlu0 %709, %v696
          %v711 = vpop.permute.xlu0 %710
          %714 = vset.pattern.permute.xlu0 0
          %715 = vperm.xlu0 %714, %v697
          %v716 = vpop.permute.xlu0 %715
          %719 = vset.pattern.permute.xlu0 0
          %720 = vperm.xlu0 %719, %v698
          %v721 = vpop.permute.xlu0 %720
          %v723 = vmul.f32 %v699, %v706
          %v724 = vmul.f32 %v700, %v711
          %v725 = vmul.f32 %v701, %v716
          %v726 = vmul.f32 %v702, %v721
          %728 = vrot.lane.b32.xlu0 %v724, 32
          %v729 = vpop.permute.xlu0 %728
          %732 = vrot.lane.b32.xlu0 %v725, 64
          %v733 = vpop.permute.xlu0 %732
          %736 = vrot.lane.b32.xlu0 %v726, 96
          %v737 = vpop.permute.xlu0 %736
          %v739 = vsel %vm384, %v723, %v729
          %vm740 = vcmask 523264
          %v741 = vsel %vm740, %v739, %v733
          %vm742 = vcmask 785408
          %v743 = vsel %vm742, %v741, %v737
          %744 = vst [vmem:[%s324] sm:$0xff] %v743
        $region52: #{tpu_custom_call.1} parent=31 // pred_fallthru
          _
        %s745 = sand.u32 %s151, 1
        %s746 = scalar_lea.sflag [#allocation8], %s745
        %s747 = sand.u32 %s151, 1
        %s748 = smul.addr %s747, 8
        %s749 = scalar_lea.vmem [#allocation12], %s748
        // Predicated region
        $region53: #{tpu_custom_call.1} parent=31 // pred_check
          %p750 = pneg %p161
        $region54: #{tpu_custom_call.1} parent=31 // pred_check_branch
          %752 = sbr.rel (%p750) target = $region56
        $region55: #{tpu_custom_call.1} parent=31 // pred_region
          %754 = vsyncadd %s746, 0
          %s755 = sadd.s32 %s30, %s31
          %s756 = sadd.s32 %s755, %s29
          %s757 = smul.addr %s756, 8
          %s758 = scalar_lea.hbm %s3, %s757
          %s760 = sshll.u32 %s749, 4
          %s761 = int_to_ptr.vmem [resolvable:$true] %s760
          %s762 = sshll.u32 %s758, 4
          %s763 = int_to_ptr.hbm [resolvable:$true] %s762
          %765 = dma.vmem_to_hbm [thread:$0]  %s761, 128, %s763, %s746
        $region56: #{tpu_custom_call.1} parent=31 // pred_fallthru
          _
      $region32: #{tpu_custom_call.1} parent=5 // pred_fallthru
        _
      %p766 = scmp.le.s32.totalorder 2, %s18
      // Predicated region
      $region57: #{tpu_custom_call.1} parent=5 // pred_check
        %p767 = pneg %p766
      $region58: #{tpu_custom_call.1} parent=5 // pred_check_branch
        %769 = sbr.rel (%p767) target = $region60
      $region59: #{tpu_custom_call.1} parent=5 // pred_region
        %s770 = ssub.s32 %s18, 2
        // Predicated region
        $region61: #{tpu_custom_call.1} parent=59 // pred_check
          %p771 = pneg %p167
        $region62: #{tpu_custom_call.1} parent=59 // pred_check_branch
          %773 = sbr.rel (%p771) target = $region64
        $region63: #{tpu_custom_call.1} parent=59 // pred_region
          %s774 = sand.u32 %s152, 1
          %s775 = scalar_lea.sflag [#allocation8], %s774
          %s776 = sand.u32 %s152, 1
          %s777 = smul.addr %s776, 8
          %s778 = scalar_lea.vmem [#allocation12], %s777
          %780 = dma.done %s775, 128
        $region64: #{tpu_custom_call.1} parent=59 // pred_fallthru
          _
      $region60: #{tpu_custom_call.1} parent=5 // pred_fallthru
        _
    $region6: #{tpu_custom_call.1} parent=1 // loop_footer
      %s22 = sadd.s32 1, %s18
    $region7: #{tpu_custom_call.1} parent=1 // loop_footer_branch
      %17 = sbr.rel target = $region3
    $region8: #{tpu_custom_call.1} parent=1 // loop_exit
      _
    %781 = vsyncpa [#allocation7], 1
    %s782 = scalar_lea.sflag [#allocation7], 1
    %783 = vsyncpa %s782, 1
    %784 = vsyncpa [#allocation10], 1
    %s785 = scalar_lea.sflag [#allocation10], 1
    %786 = vsyncpa %s785, 1
    %787 = vsyncpa [#allocation8], 1
    %s788 = scalar_lea.sflag [#allocation8], 1
    %789 = vsyncpa %s788, 1

</llo_original>
